<compile_context>
chip_gen: v5e
topology: v5e:2x2
jax: 0.10.0
libtpu: 0.0.40
codegen_flags: <defaults>
</compile_context>

<pallas_src>
import jax
import jax.numpy as jnp
from jax import lax
from jax.experimental import pallas as pl
from jax.experimental.pallas import tpu as pltpu

_TAU = 1.0        # F.gumbel_softmax(..., tau=1.0); tau > 0 does not change the argmax
_LN_EPS = 1e-5    # PyTorch LayerNorm default eps


def _adaptive_module_kernel(
    lid_ref,                                   # scalar prefetch (SMEM), used by index_maps
    xcls_ref, ycls_ref, cgate_ref, lp_ref,
    wdx_ref, wdy_ref, gamma_ref, beta_ref,
    x_ref, y_ref, q_ref,
    o_ref,
):
    del lid_ref  # only consumed by the index_maps

    # --- per-batch hard-gumbel gate (tiny; recomputed each seq tile, keeps grid parallel)
    # gumbel_softmax(logits, tau=1, hard=True) forward value == one_hot(argmax(logits+g));
    # for 2 classes only the logit difference matters:
    #   d = 0.5*[(x_cls)·(wx0-wx1) + (y_cls)·(wy0-wy1)] + c_b
    # with c_b = 0.5*[(bx0-bx1)+(by0-by1)] + (gumbel0-gumbel1) precomputed per batch.
    lp = lp_ref[0].astype(jnp.float32)                               # (1, H)
    x_cls = xcls_ref[0].astype(jnp.float32) + lp                     # (1, H)
    y_cls = ycls_ref[0].astype(jnp.float32) + lp                     # (1, H)
    d = 0.5 * (jnp.sum(x_cls * wdx_ref[...], axis=-1, keepdims=True)
               + jnp.sum(y_cls * wdy_ref[...], axis=-1, keepdims=True))
    d = d + cgate_ref[0]                                             # (1, 1)
    gate0 = (d >= 0.0).astype(jnp.float32)                           # ties -> index 0
    gate1 = 1.0 - gate0

    # --- fusion + fusion_net + LayerNorm over the (tile_s, H) seq tile -----------
    xt = x_ref[0].astype(jnp.float32)                                # (tile_s, H)
    yt = y_ref[0].astype(jnp.float32)
    qt = q_ref[0].astype(jnp.float32)
    fused = gate0 * xt + gate1 * yt
    fused = fused + qt   # TODO(synk): fusion_net(fusion, q) modeled as elementwise add

    mean = jnp.mean(fused, axis=-1, keepdims=True)
    centered = fused - mean
    var = jnp.mean(centered * centered, axis=-1, keepdims=True)
    out = centered * lax.rsqrt(var + _LN_EPS) * gamma_ref[...] + beta_ref[...]

    # Dropout in eval mode is identity.
    o_ref[0] = out.astype(o_ref.dtype)


def _choose_seq_tile(S, H, tile_seq):
    """Largest seq tile that keeps double-buffered x/y/q/out f32 streams < ~24 MiB."""
    budget_rows = (24 * 1024 * 1024) // (4 * 4 * 2 * H)   # 4 streams * 4B * 2 buffers * H
    cap = max(8, (budget_rows // 8) * 8)
    t = min(tile_seq, cap)
    if S <= t:
        return ((S + 7) // 8) * 8                          # sublane multiple
    return max(8, (t // 8) * 8)


def adaptive_module_forward(x, y, q, layer_id, params, gumbel_noise, *, tile_seq=256):
    """AdaptiveModule.forward (eval mode).

    x, y, q:      (B, S, H) float32
    layer_id:     python int (passed to the kernel via scalar prefetch)
    gumbel_noise: (B, 2) standard-Gumbel samples for F.gumbel_softmax
    params: dict with layer_params (L, H), wx (H,2), bx (2,), wy (H,2), by (2,),
            gamma (H,), beta (H,)
    """
    B, S, H = x.shape
    L = params["layer_params"].shape[0]

    # Seq tiling: big tiles amortize per-grid-step overhead; pad ragged seq.
    tile_s = _choose_seq_tile(S, H, tile_seq)
    S_pad = ((S + tile_s - 1) // tile_s) * tile_s
    if S_pad != S:
        pad = ((0, 0), (0, S_pad - S), (0, 0))
        xp, yp, qp = jnp.pad(x, pad), jnp.pad(y, pad), jnp.pad(q, pad)
    else:
        xp, yp, qp = x, y, q

    x_cls = x[:, 0:1, :]                                  # (B, 1, H)  CLS token
    y_cls = y[:, 0:1, :]

    # Collapse the 2-wide classifiers + bias + gumbel noise to lane-dense difference
    # form (only the sign of logit0-logit1 matters for the hard gate).
    wx, bx, wy, by = params["wx"], params["bx"], params["wy"], params["by"]
    wdx = (wx[:, 0] - wx[:, 1]).reshape(1, H).astype(jnp.float32)
    wdy = (wy[:, 0] - wy[:, 1]).reshape(1, H).astype(jnp.float32)
    bias_d = 0.5 * ((bx[0] - bx[1]) + (by[0] - by[1]))
    noise_d = (gumbel_noise[:, 0] - gumbel_noise[:, 1]).astype(jnp.float32)
    cgate = (bias_d + noise_d).reshape(B, 1, 1)           # per-batch gate constant

    lp = params["layer_params"].reshape(L, 1, H)          # indexed by layer_id prefetch
    gamma = params["gamma"].reshape(1, H)
    beta = params["beta"].reshape(1, H)

    grid = (B, S_pad // tile_s)                           # seq tiles innermost

    per_batch = lambda shape: pl.BlockSpec(shape, lambda b, j, lid: (b, 0, 0))
    full2d = lambda shape: pl.BlockSpec(shape, lambda b, j, lid: (0, 0))
    tile3d = pl.BlockSpec((1, tile_s, H), lambda b, j, lid: (b, j, 0))

    out = pl.pallas_call(
        _adaptive_module_kernel,
        out_shape=jax.ShapeDtypeStruct((B, S_pad, H), x.dtype),
        grid_spec=pltpu.PrefetchScalarGridSpec(
            num_scalar_prefetch=1,                        # layer_id -> SMEM
            grid=grid,
            in_specs=[
                per_batch((1, 1, H)),                     # x[:, 0, :]
                per_batch((1, 1, H)),                     # y[:, 0, :]
                per_batch((1, 1, 1)),                     # per-batch gate constant
                pl.BlockSpec((1, 1, H),
                             lambda b, j, lid: (lid[0], 0, 0)),   # layer_params[layer_id]
                full2d((1, H)),                           # wx[:,0]-wx[:,1]
                full2d((1, H)),                           # wy[:,0]-wy[:,1]
                full2d((1, H)),                           # gamma
                full2d((1, H)),                           # beta
                tile3d,                                   # x tile
                tile3d,                                   # y tile
                tile3d,                                   # q tile
            ],
            out_specs=tile3d,
        ),
        compiler_params=pltpu.CompilerParams(
            dimension_semantics=("parallel", "parallel"),  # batch & seq tiles independent
        ),
    )(jnp.asarray([layer_id], jnp.int32),
      x_cls, y_cls, cgate, lp, wdx, wdy, gamma, beta, xp, yp, qp)

    return out[:, :S, :]


def init_params(key, hidden_size, layers):
    """Deterministic synthetic init (shapes match AdaptiveModule.__init__)."""
    H = hidden_size
    ks = jax.random.split(key, 5)
    # nn.ParameterList of (1, H) xavier_normal params -> stored as (L, H)
    xav = (2.0 / (1 + H)) ** 0.5
    layer_params = jax.random.normal(ks[0], (layers, H), jnp.float32) * xav
    # Linear(H, 2) weights stored transposed (in_features, out_features)
    wx = jax.random.normal(ks[1], (H, 2), jnp.float32) * (1.0 / H) ** 0.5
    bx = jax.random.normal(ks[2], (2,), jnp.float32) * 0.01
    wy = jax.random.normal(ks[3], (H, 2), jnp.float32) * (1.0 / H) ** 0.5
    by = jax.random.normal(ks[4], (2,), jnp.float32) * 0.01
    gamma = jnp.ones((H,), jnp.float32)   # LayerNorm(H)
    beta = jnp.zeros((H,), jnp.float32)
    return dict(layer_params=layer_params, wx=wx, bx=bx, wy=wy, by=by,
                gamma=gamma, beta=beta)


if __name__ == "__main__":
    key = jax.random.PRNGKey(0)
    bs, seq, hidden_size, layers = 2, 8, 32, 3
    layer_id = 1

    kx, ky, kq, kn, kp = jax.random.split(key, 5)
    x = jax.random.normal(kx, (bs, seq, hidden_size), jnp.float32)
    y = jax.random.normal(ky, (bs, seq, hidden_size), jnp.float32)
    q = jax.random.normal(kq, (bs, seq, hidden_size), jnp.float32)
    # Gumbel noise for F.gumbel_softmax, sampled once and shared with the reference.
    gumbel = jax.random.gumbel(kn, (bs, 2), jnp.float32)

    params = init_params(kp, hidden_size, layers)

    out = adaptive_module_forward(x, y, q, layer_id, params, gumbel)
    jax.block_until_ready(out)

    # Pure-JAX reference (eval mode: gumbel_softmax hard=True, dropout identity).
    def ref(x, y, q, layer_id, p, noise):
        lp = p["layer_params"][layer_id]
        x_cls = x[:, 0, :] + lp
        y_cls = y[:, 0, :] + lp
        logits = 0.5 * ((x_cls @ p["wx"] + p["bx"]) + (y_cls @ p["wy"] + p["by"]))
        g = (logits + noise) / _TAU
        gates = jax.nn.one_hot(jnp.argmax(g, axis=-1), 2, dtype=jnp.float32)  # hard=True
        fused = gates[:, 0, None, None] * x + gates[:, 1, None, None] * y + q
        m = jnp.mean(fused, axis=-1, keepdims=True)
        v = jnp.mean((fused - m) ** 2, axis=-1, keepdims=True)
        return (fused - m) * lax.rsqrt(v + _LN_EPS) * p["gamma"] + p["beta"]

    expected = ref(x, y, q, layer_id, params, gumbel)
    assert out.shape == (bs, seq, hidden_size)
    assert jnp.allclose(out, expected, atol=1e-4, rtol=1e-4), "mismatch vs reference"

    print("KERNEL_OK")
</pallas_src>

<mosaic_0001>
module attributes {stable_mosaic.version = 11 : i64} {
  func.func @_adaptive_module_kernel(%arg0: i32, %arg1: i32, %arg2: memref<1xi32, #tpu.memory_space<smem>>, %arg3: memref<1x1x32xf32, #tpu.memory_space<vmem>>, %arg4: memref<1x1x32xf32, #tpu.memory_space<vmem>>, %arg5: memref<1x1x1xf32, #tpu.memory_space<vmem>>, %arg6: memref<1x1x32xf32, #tpu.memory_space<vmem>>, %arg7: memref<1x32xf32, #tpu.memory_space<vmem>>, %arg8: memref<1x32xf32, #tpu.memory_space<vmem>>, %arg9: memref<1x32xf32, #tpu.memory_space<vmem>>, %arg10: memref<1x32xf32, #tpu.memory_space<vmem>>, %arg11: memref<1x8x32xf32, #tpu.memory_space<vmem>>, %arg12: memref<1x8x32xf32, #tpu.memory_space<vmem>>, %arg13: memref<1x8x32xf32, #tpu.memory_space<vmem>>, %arg14: memref<1x8x32xf32, #tpu.memory_space<vmem>>) attributes {dimension_semantics = [#tpu.dimension_semantics<parallel>, #tpu.dimension_semantics<parallel>], iteration_bounds = array<i64: 2, 1>, scalar_prefetch = 1 : i64, scratch_operands = 0 : i64, tpu.core_type = #tpu.core_type<tc>, window_params = [{transform_indices = @transform_0, window_bounds = array<i64: 1, 1, 32>}, {transform_indices = @transform_1, window_bounds = array<i64: 1, 1, 32>}, {transform_indices = @transform_2, window_bounds = array<i64: 1, 1, 1>}, {transform_indices = @transform_3, window_bounds = array<i64: 1, 1, 32>}, {pipeline_mode = #tpu.pipeline_mode<synchronous>, transform_indices = @transform_4, window_bounds = array<i64: 1, 32>}, {pipeline_mode = #tpu.pipeline_mode<synchronous>, transform_indices = @transform_5, window_bounds = array<i64: 1, 32>}, {pipeline_mode = #tpu.pipeline_mode<synchronous>, transform_indices = @transform_6, window_bounds = array<i64: 1, 32>}, {pipeline_mode = #tpu.pipeline_mode<synchronous>, transform_indices = @transform_7, window_bounds = array<i64: 1, 32>}, {transform_indices = @transform_8, window_bounds = array<i64: 1, 8, 32>}, {transform_indices = @transform_9, window_bounds = array<i64: 1, 8, 32>}, {transform_indices = @transform_10, window_bounds = array<i64: 1, 8, 32>}, {transform_indices = @transform_11, window_bounds = array<i64: 1, 8, 32>}]} {
    %c0 = arith.constant 0 : index
    %c0_0 = arith.constant 0 : index
    %c0_1 = arith.constant 0 : index
    %0 = vector.load %arg6[%c0, %c0_0, %c0_1] : memref<1x1x32xf32, #tpu.memory_space<vmem>>, vector<1x1x32xf32>
    %1 = vector.shape_cast %0 : vector<1x1x32xf32> to vector<1x32xf32>
    %c0_2 = arith.constant 0 : index
    %c0_3 = arith.constant 0 : index
    %c0_4 = arith.constant 0 : index
    %2 = vector.load %arg3[%c0_2, %c0_3, %c0_4] : memref<1x1x32xf32, #tpu.memory_space<vmem>>, vector<1x1x32xf32>
    %3 = vector.shape_cast %2 : vector<1x1x32xf32> to vector<1x32xf32>
    %4 = arith.addf %3, %1 : vector<1x32xf32>
    %c0_5 = arith.constant 0 : index
    %c0_6 = arith.constant 0 : index
    %c0_7 = arith.constant 0 : index
    %5 = vector.load %arg4[%c0_5, %c0_6, %c0_7] : memref<1x1x32xf32, #tpu.memory_space<vmem>>, vector<1x1x32xf32>
    %6 = vector.shape_cast %5 : vector<1x1x32xf32> to vector<1x32xf32>
    %7 = arith.addf %6, %1 : vector<1x32xf32>
    %c0_8 = arith.constant 0 : index
    %c0_9 = arith.constant 0 : index
    %8 = vector.load %arg7[%c0_8, %c0_9] : memref<1x32xf32, #tpu.memory_space<vmem>>, vector<1x32xf32>
    %9 = arith.mulf %4, %8 : vector<1x32xf32>
    %cst = arith.constant dense<0.000000e+00> : vector<1xf32>
    %10 = vector.multi_reduction <add>, %9, %cst [1] : vector<1x32xf32> to vector<1xf32>
    %11 = vector.shape_cast %10 : vector<1xf32> to vector<1x1xf32>
    %c0_10 = arith.constant 0 : index
    %c0_11 = arith.constant 0 : index
    %12 = vector.load %arg8[%c0_10, %c0_11] : memref<1x32xf32, #tpu.memory_space<vmem>>, vector<1x32xf32>
    %13 = arith.mulf %7, %12 : vector<1x32xf32>
    %cst_12 = arith.constant dense<0.000000e+00> : vector<1xf32>
    %14 = vector.multi_reduction <add>, %13, %cst_12 [1] : vector<1x32xf32> to vector<1xf32>
    %15 = vector.shape_cast %14 : vector<1xf32> to vector<1x1xf32>
    %16 = arith.addf %11, %15 : vector<1x1xf32>
    %cst_13 = arith.constant 5.000000e-01 : f32
    %17 = vector.broadcast %cst_13 : f32 to vector<1x1xf32>
    %18 = arith.mulf %17, %16 : vector<1x1xf32>
    %c0_14 = arith.constant 0 : index
    %c0_15 = arith.constant 0 : index
    %c0_16 = arith.constant 0 : index
    %19 = vector.load %arg5[%c0_14, %c0_15, %c0_16] : memref<1x1x1xf32, #tpu.memory_space<vmem>>, vector<1x1x1xf32>
    %20 = vector.shape_cast %19 : vector<1x1x1xf32> to vector<1x1xf32>
    %21 = arith.addf %18, %20 : vector<1x1xf32>
    %cst_17 = arith.constant 0.000000e+00 : f32
    %22 = vector.broadcast %cst_17 : f32 to vector<1x1xf32>
    %23 = arith.cmpf oge, %21, %22 : vector<1x1xf32>
    %24 = arith.extui %23 : vector<1x1xi1> to vector<1x1xi32>
    %25 = arith.sitofp %24 : vector<1x1xi32> to vector<1x1xf32>
    %cst_18 = arith.constant 1.000000e+00 : f32
    %26 = vector.broadcast %cst_18 : f32 to vector<1x1xf32>
    %27 = arith.subf %26, %25 : vector<1x1xf32>
    %c0_19 = arith.constant 0 : index
    %c0_20 = arith.constant 0 : index
    %c0_21 = arith.constant 0 : index
    %28 = vector.load %arg11[%c0_19, %c0_20, %c0_21] : memref<1x8x32xf32, #tpu.memory_space<vmem>>, vector<1x8x32xf32>
    %29 = vector.shape_cast %28 : vector<1x8x32xf32> to vector<8x32xf32>
    %c0_22 = arith.constant 0 : index
    %c0_23 = arith.constant 0 : index
    %c0_24 = arith.constant 0 : index
    %30 = vector.load %arg12[%c0_22, %c0_23, %c0_24] : memref<1x8x32xf32, #tpu.memory_space<vmem>>, vector<1x8x32xf32>
    %31 = vector.shape_cast %30 : vector<1x8x32xf32> to vector<8x32xf32>
    %c0_25 = arith.constant 0 : index
    %c0_26 = arith.constant 0 : index
    %c0_27 = arith.constant 0 : index
    %32 = vector.load %arg13[%c0_25, %c0_26, %c0_27] : memref<1x8x32xf32, #tpu.memory_space<vmem>>, vector<1x8x32xf32>
    %33 = vector.shape_cast %32 : vector<1x8x32xf32> to vector<8x32xf32>
    %34 = vector.broadcast %25 : vector<1x1xf32> to vector<8x32xf32>
    %35 = arith.mulf %34, %29 : vector<8x32xf32>
    %36 = vector.broadcast %27 : vector<1x1xf32> to vector<8x32xf32>
    %37 = arith.mulf %36, %31 : vector<8x32xf32>
    %38 = arith.addf %35, %37 : vector<8x32xf32>
    %39 = arith.addf %38, %33 : vector<8x32xf32>
    %cst_28 = arith.constant dense<0.000000e+00> : vector<8xf32>
    %40 = vector.multi_reduction <add>, %39, %cst_28 [1] : vector<8x32xf32> to vector<8xf32>
    %41 = vector.shape_cast %40 : vector<8xf32> to vector<8x1xf32>
    %cst_29 = arith.constant 3.200000e+01 : f32
    %42 = vector.broadcast %cst_29 : f32 to vector<8x1xf32>
    %43 = arith.divf %41, %42 : vector<8x1xf32>
    %44 = vector.broadcast %43 : vector<8x1xf32> to vector<8x32xf32>
    %45 = arith.subf %39, %44 : vector<8x32xf32>
    %46 = arith.mulf %45, %45 : vector<8x32xf32>
    %cst_30 = arith.constant dense<0.000000e+00> : vector<8xf32>
    %47 = vector.multi_reduction <add>, %46, %cst_30 [1] : vector<8x32xf32> to vector<8xf32>
    %48 = vector.shape_cast %47 : vector<8xf32> to vector<8x1xf32>
    %cst_31 = arith.constant 3.200000e+01 : f32
    %49 = vector.broadcast %cst_31 : f32 to vector<8x1xf32>
    %50 = arith.divf %48, %49 : vector<8x1xf32>
    %cst_32 = arith.constant 9.99999974E-6 : f32
    %51 = vector.broadcast %cst_32 : f32 to vector<8x1xf32>
    %52 = arith.addf %50, %51 : vector<8x1xf32>
    %53 = math.rsqrt %52 : vector<8x1xf32>
    %54 = vector.broadcast %53 : vector<8x1xf32> to vector<8x32xf32>
    %55 = arith.mulf %45, %54 : vector<8x32xf32>
    %c0_33 = arith.constant 0 : index
    %c0_34 = arith.constant 0 : index
    %56 = vector.load %arg9[%c0_33, %c0_34] : memref<1x32xf32, #tpu.memory_space<vmem>>, vector<1x32xf32>
    %57 = vector.broadcast %56 : vector<1x32xf32> to vector<8x32xf32>
    %58 = arith.mulf %55, %57 : vector<8x32xf32>
    %c0_35 = arith.constant 0 : index
    %c0_36 = arith.constant 0 : index
    %59 = vector.load %arg10[%c0_35, %c0_36] : memref<1x32xf32, #tpu.memory_space<vmem>>, vector<1x32xf32>
    %60 = vector.broadcast %59 : vector<1x32xf32> to vector<8x32xf32>
    %61 = arith.addf %58, %60 : vector<8x32xf32>
    %c0_37 = arith.constant 0 : index
    %c0_38 = arith.constant 0 : index
    %c0_39 = arith.constant 0 : index
    %62 = vector.load %arg14[%c0_37, %c0_38, %c0_39] : memref<1x8x32xf32, #tpu.memory_space<vmem>>, vector<1x8x32xf32>
    %63 = vector.shape_cast %62 : vector<1x8x32xf32> to vector<8x32xf32>
    %64 = vector.shape_cast %61 : vector<8x32xf32> to vector<1x8x32xf32>
    tpu.vector_store %arg14[%c0_37, %c0_38, %c0_39], %64 {strides = array<i32>} : memref<1x8x32xf32, #tpu.memory_space<vmem>>, vector<1x8x32xf32>,
    return
  }
  func.func @transform_0(%arg0: i32, %arg1: i32, %arg2: memref<1xi32, #tpu.memory_space<smem>>) -> (i32, i32, i32) {
    %c0_i32 = arith.constant 0 : i32
    %c0_i32_0 = arith.constant 0 : i32
    %c0_i32_1 = arith.constant 0 : i32
    return %arg0, %c0_i32, %c0_i32_0 : i32, i32, i32
  }
  func.func @transform_1(%arg0: i32, %arg1: i32, %arg2: memref<1xi32, #tpu.memory_space<smem>>) -> (i32, i32, i32) {
    %c0_i32 = arith.constant 0 : i32
    %c0_i32_0 = arith.constant 0 : i32
    %c0_i32_1 = arith.constant 0 : i32
    return %arg0, %c0_i32, %c0_i32_0 : i32, i32, i32
  }
  func.func @transform_2(%arg0: i32, %arg1: i32, %arg2: memref<1xi32, #tpu.memory_space<smem>>) -> (i32, i32, i32) {
    %c0_i32 = arith.constant 0 : i32
    %c0_i32_0 = arith.constant 0 : i32
    %c0_i32_1 = arith.constant 0 : i32
    return %arg0, %c0_i32, %c0_i32_0 : i32, i32, i32
  }
  func.func @transform_3(%arg0: i32, %arg1: i32, %arg2: memref<1xi32, #tpu.memory_space<smem>>) -> (i32, i32, i32) {
    %c0 = arith.constant 0 : index
    %0 = memref.load %arg2[%c0] : memref<1xi32, #tpu.memory_space<smem>>
    %c0_i32 = arith.constant 0 : i32
    %c0_i32_0 = arith.constant 0 : i32
    %c0_i32_1 = arith.constant 0 : i32
    return %0, %c0_i32, %c0_i32_0 : i32, i32, i32
  }
  func.func @transform_4(%arg0: i32, %arg1: i32, %arg2: memref<1xi32, #tpu.memory_space<smem>>) -> (i32, i32) {
    %c0_i32 = arith.constant 0 : i32
    %c0_i32_0 = arith.constant 0 : i32
    %c0_i32_1 = arith.constant 0 : i32
    return %c0_i32, %c0_i32_0 : i32, i32
  }
  func.func @transform_5(%arg0: i32, %arg1: i32, %arg2: memref<1xi32, #tpu.memory_space<smem>>) -> (i32, i32) {
    %c0_i32 = arith.constant 0 : i32
    %c0_i32_0 = arith.constant 0 : i32
    %c0_i32_1 = arith.constant 0 : i32
    return %c0_i32, %c0_i32_0 : i32, i32
  }
  func.func @transform_6(%arg0: i32, %arg1: i32, %arg2: memref<1xi32, #tpu.memory_space<smem>>) -> (i32, i32) {
    %c0_i32 = arith.constant 0 : i32
    %c0_i32_0 = arith.constant 0 : i32
    %c0_i32_1 = arith.constant 0 : i32
    return %c0_i32, %c0_i32_0 : i32, i32
  }
  func.func @transform_7(%arg0: i32, %arg1: i32, %arg2: memref<1xi32, #tpu.memory_space<smem>>) -> (i32, i32) {
    %c0_i32 = arith.constant 0 : i32
    %c0_i32_0 = arith.constant 0 : i32
    %c0_i32_1 = arith.constant 0 : i32
    return %c0_i32, %c0_i32_0 : i32, i32
  }
  func.func @transform_8(%arg0: i32, %arg1: i32, %arg2: memref<1xi32, #tpu.memory_space<smem>>) -> (i32, i32, i32) {
    %c0_i32 = arith.constant 0 : i32
    %c0_i32_0 = arith.constant 0 : i32
    return %arg0, %arg1, %c0_i32 : i32, i32, i32
  }
  func.func @transform_9(%arg0: i32, %arg1: i32, %arg2: memref<1xi32, #tpu.memory_space<smem>>) -> (i32, i32, i32) {
    %c0_i32 = arith.constant 0 : i32
    %c0_i32_0 = arith.constant 0 : i32
    return %arg0, %arg1, %c0_i32 : i32, i32, i32
  }
  func.func @transform_10(%arg0: i32, %arg1: i32, %arg2: memref<1xi32, #tpu.memory_space<smem>>) -> (i32, i32, i32) {
    %c0_i32 = arith.constant 0 : i32
    %c0_i32_0 = arith.constant 0 : i32
    return %arg0, %arg1, %c0_i32 : i32, i32, i32
  }
  func.func @transform_11(%arg0: i32, %arg1: i32, %arg2: memref<1xi32, #tpu.memory_space<smem>>) -> (i32, i32, i32) {
    %c0_i32 = arith.constant 0 : i32
    %c0_i32_0 = arith.constant 0 : i32
    return %arg0, %arg1, %c0_i32 : i32, i32, i32
  }
}

</mosaic_0001>

<llo_original>
// kernel: tpu_custom_call.1
$region0: #{tpu_custom_call.1}
  #allocation0 [shape = 'u32[]', space=smem, size = 0x4, offset = 0x4, fixed_abs, tag = 'smem constant byte address 0x4 - core index']
  #allocation1 [shape = 'u32[72,128]{1,0:T(1,128)}', space=vmem, size = 0x9000, scoped, tag = 'internal scratch']
  #allocation2 [shape = 's32[1]{0}', space=sflag, size = 0x4, scoped, tag = 'scoped memory for tpu_custom_call.1']
  #allocation3 [shape = 's32[1]{0:T(128)S(6)}', space=smem, size = 0x200, scoped, tag = 'prefetched SMEM operand 0']
  %s0 = inlined_call_operand.<no memory space> [shape: s32[1], index: 0, kind: input, shape index: {}]
  %s1 = inlined_call_operand.hbm [shape: f32[2,1,32], index: 1, kind: input, shape index: {}]
  %s2 = inlined_call_operand.hbm [shape: f32[2,1,32], index: 2, kind: input, shape index: {}]
  %s3 = inlined_call_operand.vmem [shape: f32[2,1,1], index: 3, kind: input, shape index: {}]
  %s4 = inlined_call_operand.vmem [shape: f32[3,1,32], index: 4, kind: input, shape index: {}]
  %s5 = inlined_call_operand.vmem [shape: f32[1,32], index: 5, kind: input, shape index: {}]
  %s6 = inlined_call_operand.vmem [shape: f32[1,32], index: 6, kind: input, shape index: {}]
  %s7 = inlined_call_operand.vmem [shape: f32[1,32], index: 7, kind: input, shape index: {}]
  %s8 = inlined_call_operand.vmem [shape: f32[1,32], index: 8, kind: input, shape index: {}]
  %s9 = inlined_call_operand.hbm [shape: f32[2,8,32], index: 9, kind: input, shape index: {}]
  %s10 = inlined_call_operand.hbm [shape: f32[2,8,32], index: 10, kind: input, shape index: {}]
  %s11 = inlined_call_operand.hbm [shape: f32[2,8,32], index: 11, kind: input, shape index: {}]
  %s12 = inlined_call_operand.hbm [shape: f32[2,8,32], index: 12, kind: output, shape index: {}]
  %s13 = sld [smem:[#allocation0]]
  $region97: #{tpu_custom_call.1} parent=0
    _
  %s15 = ssub.s32 1, %s13
  %s16 = scalar_select 0, %s15, %s13
  %17 = sst [smem:[#allocation3]] %s0
  $region1: #{tpu_custom_call.1} parent=0
    #allocation4 [shape = 'u8[1024]{0}', space=vmem, size = 0x400, scoped, tag = 'input window, operand 1']
    #allocation5 [shape = 's32[2]{0}', space=sflag, size = 0x8, scoped, tag = 'scoped memory for tpu_custom_call.1']
    #allocation6 [shape = 's32[2]{0}', space=sflag, size = 0x8, scoped, tag = 'scoped memory for tpu_custom_call.1']
    #allocation7 [shape = 'u8[1024]{0}', space=vmem, size = 0x400, scoped, tag = 'input window, operand 2']
    #allocation8 [shape = 's32[2]{0}', space=sflag, size = 0x8, scoped, tag = 'scoped memory for tpu_custom_call.1']
    #allocation9 [shape = 'u8[8192]{0}', space=vmem, size = 0x2000, scoped, tag = 'input window, operand 9']
    #allocation10 [shape = 'u8[8192]{0}', space=vmem, size = 0x2000, scoped, tag = 'input window, operand 10']
    #allocation11 [shape = 's32[2]{0}', space=sflag, size = 0x8, scoped, tag = 'scoped memory for tpu_custom_call.1']
    #allocation12 [shape = 'u8[8192]{0}', space=vmem, size = 0x2000, scoped, tag = 'input window, operand 11']
    #allocation13 [shape = 'u8[8192]{0}', space=vmem, size = 0x2000, scoped, tag = 'output window, operand 0']
    %18 = vsyncpa [#allocation5], 0
    %s19 = scalar_lea.sflag [#allocation5], 1
    %20 = vsyncpa %s19, 0
    %21 = vsyncpa [#allocation8], 0
    %s22 = scalar_lea.sflag [#allocation8], 1
    %23 = vsyncpa %s22, 0
    %24 = vsyncpa [#allocation11], 0
    %s25 = scalar_lea.sflag [#allocation11], 1
    %26 = vsyncpa %s25, 0
    %27 = vsyncpa [#allocation6], 0
    %s28 = scalar_lea.sflag [#allocation6], 1
    %29 = vsyncpa %s28, 0
    loop: start=0, step=1, limit=4
    $region2: #{tpu_custom_call.1} parent=1 // loop_pre_header
      _
    $region3: #{tpu_custom_call.1} parent=1 // loop_header
      %s31 = sphi 0, %s35
      %p32 = scmp.ge.s32.totalorder %s31, 4
      %s38 = sphi 0, %s50
      %s39 = sphi 0, %s46
      %s40 = sphi 0, %s38
      %s41 = sphi 0, %s39
      %s42 = sphi 0, %s40
      %s43 = sphi 0, %s41
      %s53 = sphi 0, %s55
      %s56 = sphi 0, %s53
      %s57 = sphi 0, %s56
      %s73 = sphi 0, %s57
      %s79 = sphi 0, %s81
      %s82 = sphi 0, %s79
      %s83 = sphi 0, %s82
      %s99 = sphi 0, %s83
      %s105 = sphi 0, %s107
      %s108 = sphi 0, %s105
      %s109 = sphi 0, %s108
      %s125 = sphi 0, %s109
      %s133 = sphi 0, %s135
      %s136 = sphi 0, %s133
      %s137 = sphi 0, %s136
      %s153 = sphi 0, %s137
      %s157 = sphi 0, %s157
      %s159 = sphi 0, %s157
      %s160 = sphi 0, %s159
      %s174 = sphi 0, %s160
      %s178 = sphi 0, %s178
      %s180 = sphi 0, %s178
      %s181 = sphi 0, %s180
      %s195 = sphi 0, %s181
      %s199 = sphi 0, %s199
      %s201 = sphi 0, %s199
      %s202 = sphi 0, %s201
      %s216 = sphi 0, %s202
      %s220 = sphi 0, %s220
      %s222 = sphi 0, %s220
      %s223 = sphi 0, %s222
      %s237 = sphi 0, %s223
      %s245 = sphi 0, %s247
      %s248 = sphi 0, %s245
      %s249 = sphi 0, %s248
      %s265 = sphi 0, %s249
      %s273 = sphi 0, %s275
      %s276 = sphi 0, %s273
      %s277 = sphi 0, %s276
      %s293 = sphi 0, %s277
      %s301 = sphi 0, %s303
      %s304 = sphi 0, %s301
      %s305 = sphi 0, %s304
      %s321 = sphi 0, %s305
      %s329 = sphi 0, %s331
      %s332 = sphi 0, %s329
      %s333 = sphi 0, %s332
      %s349 = sphi 0, %s333
    $region4: #{tpu_custom_call.1} parent=1 // loop_header_branch
      %34 = sbr.rel (%p32) target = $region8
    $region5: #{tpu_custom_call.1} parent=1 // loop_body
      %s36 = ssub.s32 %s31, 1
      %s37 = ssub.s32 %s31, 2
      %s44 = sadd.s32 1, %s39
      %p45 = scmp.ge.s32.totalorder %s44, 1
      %s46 = scalar_select %p45, 0, %s44
      %s47 = sadd.s32 1, %s38
      %s48 = scalar_select %p45, %s47, %s38
      %p49 = scmp.ge.s32.totalorder %s48, 2
      %s50 = scalar_select %p49, 0, %s48
      %s51 = ssub.s32 %s38, %s50
      %p52 = scmp.eq.s32.totalorder %s51, 0
      %s54 = sadd.s32 %s53, 1
      %s55 = scalar_select %p52, %s53, %s54
      %p58 = pneg %p52
      %p59 = scmp.eq.s32.totalorder %s31, 1
      %p60 = por %p58, %p59
      %p61 = scmp.ne.s32.totalorder %s53, %s56
      %p62 = scmp.eq.s32.totalorder %s31, 0
      %p63 = por %p61, %p62
      %p64 = scmp.ne.s32.totalorder %s53, %s56
      %p65 = scmp.eq.s32.totalorder %s36, 1
      %p66 = por %p64, %p65
      %p67 = scmp.ne.s32.totalorder %s56, %s57
      %p68 = scmp.eq.s32.totalorder %s36, 0
      %p69 = por %p67, %p68
      %p70 = scmp.ne.s32.totalorder %s56, %s57
      %p71 = scmp.eq.s32.totalorder %s37, 1
      %p72 = por %p70, %p71
      %p74 = scmp.ne.s32.totalorder %s57, %s73
      %p75 = scmp.eq.s32.totalorder %s37, 0
      %p76 = por %p74, %p75
      %s77 = ssub.s32 %s38, %s50
      %p78 = scmp.eq.s32.totalorder %s77, 0
      %s80 = sadd.s32 %s79, 1
      %s81 = scalar_select %p78, %s79, %s80
      %p84 = pneg %p78
      %p85 = scmp.eq.s32.totalorder %s31, 1
      %p86 = por %p84, %p85
      %p87 = scmp.ne.s32.totalorder %s79, %s82
      %p88 = scmp.eq.s32.totalorder %s31, 0
      %p89 = por %p87, %p88
      %p90 = scmp.ne.s32.totalorder %s79, %s82
      %p91 = scmp.eq.s32.totalorder %s36, 1
      %p92 = por %p90, %p91
      %p93 = scmp.ne.s32.totalorder %s82, %s83
      %p94 = scmp.eq.s32.totalorder %s36, 0
      %p95 = por %p93, %p94
      %p96 = scmp.ne.s32.totalorder %s82, %s83
      %p97 = scmp.eq.s32.totalorder %s37, 1
      %p98 = por %p96, %p97
      %p100 = scmp.ne.s32.totalorder %s83, %s99
      %p101 = scmp.eq.s32.totalorder %s37, 0
      %p102 = por %p100, %p101
      %s103 = ssub.s32 %s38, %s50
      %p104 = scmp.eq.s32.totalorder %s103, 0
      %s106 = sadd.s32 %s105, 1
      %s107 = scalar_select %p104, %s105, %s106
      %p110 = pneg %p104
      %p111 = scmp.eq.s32.totalorder %s31, 1
      %p112 = por %p110, %p111
      %p113 = scmp.ne.s32.totalorder %s105, %s108
      %p114 = scmp.eq.s32.totalorder %s31, 0
      %p115 = por %p113, %p114
      %p116 = scmp.ne.s32.totalorder %s105, %s108
      %p117 = scmp.eq.s32.totalorder %s36, 1
      %p118 = por %p116, %p117
      %p119 = scmp.ne.s32.totalorder %s108, %s109
      %p120 = scmp.eq.s32.totalorder %s36, 0
      %p121 = por %p119, %p120
      %p122 = scmp.ne.s32.totalorder %s108, %s109
      %p123 = scmp.eq.s32.totalorder %s37, 1
      %p124 = por %p122, %p123
      %p126 = scmp.ne.s32.totalorder %s109, %s125
      %p127 = scmp.eq.s32.totalorder %s37, 0
      %p128 = por %p126, %p127
      %s129 = sld [smem:[#allocation3]]
      %s130 = sld [smem:[#allocation3]]
      %s131 = ssub.s32 %s129, %s130
      %p132 = scmp.eq.s32.totalorder %s131, 0
      %s134 = sadd.s32 %s133, 1
      %s135 = scalar_select %p132, %s133, %s134
      %p138 = pneg %p132
      %p139 = scmp.eq.s32.totalorder %s31, 1
      %p140 = por %p138, %p139
      %p141 = scmp.ne.s32.totalorder %s133, %s136
      %p142 = scmp.eq.s32.totalorder %s31, 0
      %p143 = por %p141, %p142
      %p144 = scmp.ne.s32.totalorder %s133, %s136
      %p145 = scmp.eq.s32.totalorder %s36, 1
      %p146 = por %p144, %p145
      %p147 = scmp.ne.s32.totalorder %s136, %s137
      %p148 = scmp.eq.s32.totalorder %s36, 0
      %p149 = por %p147, %p148
      %p150 = scmp.ne.s32.totalorder %s136, %s137
      %p151 = scmp.eq.s32.totalorder %s37, 1
      %p152 = por %p150, %p151
      %p154 = scmp.ne.s32.totalorder %s137, %s153
      %p155 = scmp.eq.s32.totalorder %s37, 0
      %p156 = por %p154, %p155
      %s158 = sadd.s32 %s157, 1
      %p161 = scmp.eq.s32.totalorder %s31, 1
      %p162 = scmp.ne.s32.totalorder %s157, %s159
      %p163 = scmp.eq.s32.totalorder %s31, 0
      %p164 = por %p162, %p163
      %p165 = scmp.ne.s32.totalorder %s157, %s159
      %p166 = scmp.eq.s32.totalorder %s36, 1
      %p167 = por %p165, %p166
      %p168 = scmp.ne.s32.totalorder %s159, %s160
      %p169 = scmp.eq.s32.totalorder %s36, 0
      %p170 = por %p168, %p169
      %p171 = scmp.ne.s32.totalorder %s159, %s160
      %p172 = scmp.eq.s32.totalorder %s37, 1
      %p173 = por %p171, %p172
      %p175 = scmp.ne.s32.totalorder %s160, %s174
      %p176 = scmp.eq.s32.totalorder %s37, 0
      %p177 = por %p175, %p176
      %s179 = sadd.s32 %s178, 1
      %p182 = scmp.eq.s32.totalorder %s31, 1
      %p183 = scmp.ne.s32.totalorder %s178, %s180
      %p184 = scmp.eq.s32.totalorder %s31, 0
      %p185 = por %p183, %p184
      %p186 = scmp.ne.s32.totalorder %s178, %s180
      %p187 = scmp.eq.s32.totalorder %s36, 1
      %p188 = por %p186, %p187
      %p189 = scmp.ne.s32.totalorder %s180, %s181
      %p190 = scmp.eq.s32.totalorder %s36, 0
      %p191 = por %p189, %p190
      %p192 = scmp.ne.s32.totalorder %s180, %s181
      %p193 = scmp.eq.s32.totalorder %s37, 1
      %p194 = por %p192, %p193
      %p196 = scmp.ne.s32.totalorder %s181, %s195
      %p197 = scmp.eq.s32.totalorder %s37, 0
      %p198 = por %p196, %p197
      %s200 = sadd.s32 %s199, 1
      %p203 = scmp.eq.s32.totalorder %s31, 1
      %p204 = scmp.ne.s32.totalorder %s199, %s201
      %p205 = scmp.eq.s32.totalorder %s31, 0
      %p206 = por %p204, %p205
      %p207 = scmp.ne.s32.totalorder %s199, %s201
      %p208 = scmp.eq.s32.totalorder %s36, 1
      %p209 = por %p207, %p208
      %p210 = scmp.ne.s32.totalorder %s201, %s202
      %p211 = scmp.eq.s32.totalorder %s36, 0
      %p212 = por %p210, %p211
      %p213 = scmp.ne.s32.totalorder %s201, %s202
      %p214 = scmp.eq.s32.totalorder %s37, 1
      %p215 = por %p213, %p214
      %p217 = scmp.ne.s32.totalorder %s202, %s216
      %p218 = scmp.eq.s32.totalorder %s37, 0
      %p219 = por %p217, %p218
      %s221 = sadd.s32 %s220, 1
      %p224 = scmp.eq.s32.totalorder %s31, 1
      %p225 = scmp.ne.s32.totalorder %s220, %s222
      %p226 = scmp.eq.s32.totalorder %s31, 0
      %p227 = por %p225, %p226
      %p228 = scmp.ne.s32.totalorder %s220, %s222
      %p229 = scmp.eq.s32.totalorder %s36, 1
      %p230 = por %p228, %p229
      %p231 = scmp.ne.s32.totalorder %s222, %s223
      %p232 = scmp.eq.s32.totalorder %s36, 0
      %p233 = por %p231, %p232
      %p234 = scmp.ne.s32.totalorder %s222, %s223
      %p235 = scmp.eq.s32.totalorder %s37, 1
      %p236 = por %p234, %p235
      %p238 = scmp.ne.s32.totalorder %s223, %s237
      %p239 = scmp.eq.s32.totalorder %s37, 0
      %p240 = por %p238, %p239
      %s241 = ssub.s32 %s38, %s50
      %s242 = ssub.s32 %s39, %s46
      %s243 = sor.u32 %s241, %s242
      %p244 = scmp.eq.s32.totalorder %s243, 0
      %s246 = sadd.s32 %s245, 1
      %s247 = scalar_select %p244, %s245, %s246
      %p250 = pneg %p244
      %p251 = scmp.eq.s32.totalorder %s31, 1
      %p252 = por %p250, %p251
      %p253 = scmp.ne.s32.totalorder %s245, %s248
      %p254 = scmp.eq.s32.totalorder %s31, 0
      %p255 = por %p253, %p254
      %p256 = scmp.ne.s32.totalorder %s245, %s248
      %p257 = scmp.eq.s32.totalorder %s36, 1
      %p258 = por %p256, %p257
      %p259 = scmp.ne.s32.totalorder %s248, %s249
      %p260 = scmp.eq.s32.totalorder %s36, 0
      %p261 = por %p259, %p260
      %p262 = scmp.ne.s32.totalorder %s248, %s249
      %p263 = scmp.eq.s32.totalorder %s37, 1
      %p264 = por %p262, %p263
      %p266 = scmp.ne.s32.totalorder %s249, %s265
      %p267 = scmp.eq.s32.totalorder %s37, 0
      %p268 = por %p266, %p267
      %s269 = ssub.s32 %s38, %s50
      %s270 = ssub.s32 %s39, %s46
      %s271 = sor.u32 %s269, %s270
      %p272 = scmp.eq.s32.totalorder %s271, 0
      %s274 = sadd.s32 %s273, 1
      %s275 = scalar_select %p272, %s273, %s274
      %p278 = pneg %p272
      %p279 = scmp.eq.s32.totalorder %s31, 1
      %p280 = por %p278, %p279
      %p281 = scmp.ne.s32.totalorder %s273, %s276
      %p282 = scmp.eq.s32.totalorder %s31, 0
      %p283 = por %p281, %p282
      %p284 = scmp.ne.s32.totalorder %s273, %s276
      %p285 = scmp.eq.s32.totalorder %s36, 1
      %p286 = por %p284, %p285
      %p287 = scmp.ne.s32.totalorder %s276, %s277
      %p288 = scmp.eq.s32.totalorder %s36, 0
      %p289 = por %p287, %p288
      %p290 = scmp.ne.s32.totalorder %s276, %s277
      %p291 = scmp.eq.s32.totalorder %s37, 1
      %p292 = por %p290, %p291
      %p294 = scmp.ne.s32.totalorder %s277, %s293
      %p295 = scmp.eq.s32.totalorder %s37, 0
      %p296 = por %p294, %p295
      %s297 = ssub.s32 %s38, %s50
      %s298 = ssub.s32 %s39, %s46
      %s299 = sor.u32 %s297, %s298
      %p300 = scmp.eq.s32.totalorder %s299, 0
      %s302 = sadd.s32 %s301, 1
      %s303 = scalar_select %p300, %s301, %s302
      %p306 = pneg %p300
      %p307 = scmp.eq.s32.totalorder %s31, 1
      %p308 = por %p306, %p307
      %p309 = scmp.ne.s32.totalorder %s301, %s304
      %p310 = scmp.eq.s32.totalorder %s31, 0
      %p311 = por %p309, %p310
      %p312 = scmp.ne.s32.totalorder %s301, %s304
      %p313 = scmp.eq.s32.totalorder %s36, 1
      %p314 = por %p312, %p313
      %p315 = scmp.ne.s32.totalorder %s304, %s305
      %p316 = scmp.eq.s32.totalorder %s36, 0
      %p317 = por %p315, %p316
      %p318 = scmp.ne.s32.totalorder %s304, %s305
      %p319 = scmp.eq.s32.totalorder %s37, 1
      %p320 = por %p318, %p319
      %p322 = scmp.ne.s32.totalorder %s305, %s321
      %p323 = scmp.eq.s32.totalorder %s37, 0
      %p324 = por %p322, %p323
      %s325 = ssub.s32 %s38, %s50
      %s326 = ssub.s32 %s39, %s46
      %s327 = sor.u32 %s325, %s326
      %p328 = scmp.eq.s32.totalorder %s327, 0
      %s330 = sadd.s32 %s329, 1
      %s331 = scalar_select %p328, %s329, %s330
      %p334 = pneg %p328
      %p335 = scmp.eq.s32.totalorder %s31, 1
      %p336 = por %p334, %p335
      %p337 = scmp.ne.s32.totalorder %s329, %s332
      %p338 = scmp.eq.s32.totalorder %s31, 0
      %p339 = por %p337, %p338
      %p340 = scmp.ne.s32.totalorder %s329, %s332
      %p341 = scmp.eq.s32.totalorder %s36, 1
      %p342 = por %p340, %p341
      %p343 = scmp.ne.s32.totalorder %s332, %s333
      %p344 = scmp.eq.s32.totalorder %s36, 0
      %p345 = por %p343, %p344
      %p346 = scmp.ne.s32.totalorder %s332, %s333
      %p347 = scmp.eq.s32.totalorder %s37, 1
      %p348 = por %p346, %p347
      %p350 = scmp.ne.s32.totalorder %s333, %s349
      %p351 = scmp.eq.s32.totalorder %s37, 0
      %p352 = por %p350, %p351
      %p353 = scmp.le.s32.totalorder 1, %s31
      %p354 = scmp.lt.s32.totalorder %s31, 3
      %p355 = pnand %p353, %p354
      %p356 = pneg %p355
      // Predicated region
      $region9: #{tpu_custom_call.1} parent=5 // pred_check
        _
      $region10: #{tpu_custom_call.1} parent=5 // pred_check_branch
        %358 = sbr.rel (%p355) target = $region12
      $region11: #{tpu_custom_call.1} parent=5 // pred_region
        %s359 = ssub.s32 %s31, 1
        // Predicated region
        $region13: #{tpu_custom_call.1} parent=11 // pred_check
          %p360 = pneg %p149
        $region14: #{tpu_custom_call.1} parent=11 // pred_check_branch
          %362 = sbr.rel (%p360) target = $region16
        $region15: #{tpu_custom_call.1} parent=11 // pred_region
          %s363 = sld [smem:[#allocation3]]
          %p364 = scmp.lt.s32.totalorder %s363, 2
          %s365 = scalar_select %p364, %s363, 2
          %s366 = scalar_lea.vmem %s4, %s365
          %s367 = sld [smem:[#allocation3]]
        $region16: #{tpu_custom_call.1} parent=11 // pred_fallthru
          _
        // Predicated region
        $region17: #{tpu_custom_call.1} parent=11 // pred_check
          %p368 = pneg %p170
        $region18: #{tpu_custom_call.1} parent=11 // pred_check_branch
          %370 = sbr.rel (%p368) target = $region20
        $region19: #{tpu_custom_call.1} parent=11 // pred_region
          _
        $region20: #{tpu_custom_call.1} parent=11 // pred_fallthru
          _
        // Predicated region
        $region21: #{tpu_custom_call.1} parent=11 // pred_check
          %p371 = pneg %p191
        $region22: #{tpu_custom_call.1} parent=11 // pred_check_branch
          %373 = sbr.rel (%p371) target = $region24
        $region23: #{tpu_custom_call.1} parent=11 // pred_region
          _
        $region24: #{tpu_custom_call.1} parent=11 // pred_fallthru
          _
        // Predicated region
        $region25: #{tpu_custom_call.1} parent=11 // pred_check
          %p374 = pneg %p212
        $region26: #{tpu_custom_call.1} parent=11 // pred_check_branch
          %376 = sbr.rel (%p374) target = $region28
        $region27: #{tpu_custom_call.1} parent=11 // pred_region
          _
        $region28: #{tpu_custom_call.1} parent=11 // pred_fallthru
          _
        // Predicated region
        $region29: #{tpu_custom_call.1} parent=11 // pred_check
          %p377 = pneg %p233
        $region30: #{tpu_custom_call.1} parent=11 // pred_check_branch
          %379 = sbr.rel (%p377) target = $region32
        $region31: #{tpu_custom_call.1} parent=11 // pred_region
          _
        $region32: #{tpu_custom_call.1} parent=11 // pred_fallthru
          _
      $region12: #{tpu_custom_call.1} parent=5 // pred_fallthru
        _
      %p380 = scmp.lt.s32.totalorder %s31, 2
      // Predicated region
      $region33: #{tpu_custom_call.1} parent=5 // pred_check
        %p381 = pneg %p380
      $region34: #{tpu_custom_call.1} parent=5 // pred_check_branch
        %383 = sbr.rel (%p381) target = $region36
      $region35: #{tpu_custom_call.1} parent=5 // pred_region
        // Predicated region
        $region37: #{tpu_custom_call.1} parent=35 // pred_check
          %p384 = pneg %p63
        $region38: #{tpu_custom_call.1} parent=35 // pred_check_branch
          %386 = sbr.rel (%p384) target = $region40
        $region39: #{tpu_custom_call.1} parent=35 // pred_region
          %s387 = sand.u32 %s53, 1
          %s388 = scalar_lea.sflag [#allocation5], %s387
          %s389 = sand.u32 %s53, 1
          %s390 = scalar_lea.vmem [#allocation4], %s389
          %392 = vsyncadd %s388, 0
          %s393 = scalar_lea.hbm %s1, %s38
          %s395 = sshll.u32 %s393, 4
          %s396 = int_to_ptr.hbm [resolvable:$true] %s395
          %s397 = sshll.u32 %s390, 4
          %s398 = int_to_ptr.vmem [resolvable:$true] %s397
          %400 = dma.hbm_to_vmem [thread:$0]  %s396, 16, %s398, %s388
        $region40: #{tpu_custom_call.1} parent=35 // pred_fallthru
          _
        // Predicated region
        $region41: #{tpu_custom_call.1} parent=35 // pred_check
          %p401 = pneg %p89
        $region42: #{tpu_custom_call.1} parent=35 // pred_check_branch
          %403 = sbr.rel (%p401) target = $region44
        $region43: #{tpu_custom_call.1} parent=35 // pred_region
          %s404 = sand.u32 %s31, 1
          %s405 = scalar_lea.sflag [#allocation8], %s404
          %s406 = sand.u32 %s79, 1
          %s407 = scalar_lea.vmem [#allocation7], %s406
          %409 = vsyncadd %s405, 0
          %s410 = scalar_lea.hbm %s2, %s38
          %s412 = sshll.u32 %s410, 4
          %s413 = int_to_ptr.hbm [resolvable:$true] %s412
          %s414 = sshll.u32 %s407, 4
          %s415 = int_to_ptr.vmem [resolvable:$true] %s414
          %417 = dma.hbm_to_vmem [thread:$0]  %s413, 16, %s415, %s405
        $region44: #{tpu_custom_call.1} parent=35 // pred_fallthru
          _
        // Predicated region
        $region45: #{tpu_custom_call.1} parent=35 // pred_check
          %p418 = pneg %p115
        $region46: #{tpu_custom_call.1} parent=35 // pred_check_branch
          %420 = sbr.rel (%p418) target = $region48
        $region47: #{tpu_custom_call.1} parent=35 // pred_region
          %p421 = scmp.lt.s32.totalorder %s38, 1
          %s422 = scalar_select %p421, %s38, 1
          %s423 = scalar_lea.vmem %s3, %s422
        $region48: #{tpu_custom_call.1} parent=35 // pred_fallthru
          _
        // Predicated region
        $region49: #{tpu_custom_call.1} parent=35 // pred_check
          %p424 = pneg %p255
        $region50: #{tpu_custom_call.1} parent=35 // pred_check_branch
          %426 = sbr.rel (%p424) target = $region52
        $region51: #{tpu_custom_call.1} parent=35 // pred_region
          %s427 = sand.u32 %s31, 1
          %s428 = scalar_lea.sflag [#allocation8], %s427
          %s429 = sand.u32 %s245, 1
          %s430 = smul.addr %s429, 8
          %s431 = scalar_lea.vmem [#allocation9], %s430
          %433 = vsyncadd %s428, 0
          %s434 = sadd.s32 %s39, %s38
          %s435 = smul.addr %s434, 8
          %s436 = scalar_lea.hbm %s9, %s435
          %s438 = sshll.u32 %s436, 4
          %s439 = int_to_ptr.hbm [resolvable:$true] %s438
          %s440 = sshll.u32 %s431, 4
          %s441 = int_to_ptr.vmem [resolvable:$true] %s440
          %443 = dma.hbm_to_vmem [thread:$0]  %s439, 128, %s441, %s428
        $region52: #{tpu_custom_call.1} parent=35 // pred_fallthru
          _
        // Predicated region
        $region53: #{tpu_custom_call.1} parent=35 // pred_check
          %p444 = pneg %p283
        $region54: #{tpu_custom_call.1} parent=35 // pred_check_branch
          %446 = sbr.rel (%p444) target = $region56
        $region55: #{tpu_custom_call.1} parent=35 // pred_region
          %s447 = sand.u32 %s31, 1
          %s448 = scalar_lea.sflag [#allocation11], %s447
          %s449 = sand.u32 %s273, 1
          %s450 = smul.addr %s449, 8
          %s451 = scalar_lea.vmem [#allocation10], %s450
          %453 = vsyncadd %s448, 0
          %s454 = sadd.s32 %s39, %s38
          %s455 = smul.addr %s454, 8
          %s456 = scalar_lea.hbm %s10, %s455
          %s458 = sshll.u32 %s456, 4
          %s459 = int_to_ptr.hbm [resolvable:$true] %s458
          %s460 = sshll.u32 %s451, 4
          %s461 = int_to_ptr.vmem [resolvable:$true] %s460
          %463 = dma.hbm_to_vmem [thread:$0]  %s459, 128, %s461, %s448
        $region56: #{tpu_custom_call.1} parent=35 // pred_fallthru
          _
        // Predicated region
        $region57: #{tpu_custom_call.1} parent=35 // pred_check
          %p464 = pneg %p311
        $region58: #{tpu_custom_call.1} parent=35 // pred_check_branch
          %466 = sbr.rel (%p464) target = $region60
        $region59: #{tpu_custom_call.1} parent=35 // pred_region
          %s467 = sand.u32 %s31, 1
          %s468 = scalar_lea.sflag [#allocation11], %s467
          %s469 = sand.u32 %s301, 1
          %s470 = smul.addr %s469, 8
          %s471 = scalar_lea.vmem [#allocation12], %s470
          %473 = vsyncadd %s468, 0
          %s474 = sadd.s32 %s39, %s38
          %s475 = smul.addr %s474, 8
          %s476 = scalar_lea.hbm %s11, %s475
          %s478 = sshll.u32 %s476, 4
          %s479 = int_to_ptr.hbm [resolvable:$true] %s478
          %s480 = sshll.u32 %s471, 4
          %s481 = int_to_ptr.vmem [resolvable:$true] %s480
          %483 = dma.hbm_to_vmem [thread:$0]  %s479, 128, %s481, %s468
        $region60: #{tpu_custom_call.1} parent=35 // pred_fallthru
          _
      $region36: #{tpu_custom_call.1} parent=5 // pred_fallthru
        _
      %p484 = scmp.le.s32.totalorder 1, %s31
      %p485 = scmp.lt.s32.totalorder %s31, 3
      %p486 = pnand %p484, %p485
      %p487 = pneg %p486
      // Predicated region
      $region61: #{tpu_custom_call.1} parent=5 // pred_check
        _
      $region62: #{tpu_custom_call.1} parent=5 // pred_check_branch
        %489 = sbr.rel (%p486) target = $region64
      $region63: #{tpu_custom_call.1} parent=5 // pred_region
        %s490 = ssub.s32 %s31, 1
        %s491 = sand.u32 %s56, 1
        %s492 = scalar_lea.sflag [#allocation5], %s491
        %s493 = sand.u32 %s56, 1
        %s494 = scalar_lea.vmem [#allocation4], %s493
        // Predicated region
        $region65: #{tpu_custom_call.1} parent=63 // pred_check
          %p495 = pneg %p69
        $region66: #{tpu_custom_call.1} parent=63 // pred_check_branch
          %497 = sbr.rel (%p495) target = $region68
        $region67: #{tpu_custom_call.1} parent=63 // pred_region
          %499 = dma.done %s492, 16
        $region68: #{tpu_custom_call.1} parent=63 // pred_fallthru
          _
        %s500 = sand.u32 %s36, 1
        %s501 = scalar_lea.sflag [#allocation8], %s500
        %s502 = sand.u32 %s82, 1
        %s503 = scalar_lea.vmem [#allocation7], %s502
        // Predicated region
        $region69: #{tpu_custom_call.1} parent=63 // pred_check
          %p504 = pneg %p95
        $region70: #{tpu_custom_call.1} parent=63 // pred_check_branch
          %506 = sbr.rel (%p504) target = $region72
        $region71: #{tpu_custom_call.1} parent=63 // pred_region
          %508 = dma.done %s501, 16
        $region72: #{tpu_custom_call.1} parent=63 // pred_fallthru
          _
        %s509 = sand.u32 %s36, 1
        %s510 = scalar_lea.sflag [#allocation8], %s509
        %s511 = sand.u32 %s248, 1
        %s512 = smul.addr %s511, 8
        %s513 = scalar_lea.vmem [#allocation9], %s512
        // Predicated region
        $region73: #{tpu_custom_call.1} parent=63 // pred_check
          %p514 = pneg %p261
        $region74: #{tpu_custom_call.1} parent=63 // pred_check_branch
          %516 = sbr.rel (%p514) target = $region76
        $region75: #{tpu_custom_call.1} parent=63 // pred_region
          %518 = dma.done %s510, 128
        $region76: #{tpu_custom_call.1} parent=63 // pred_fallthru
          _
        %s519 = sand.u32 %s36, 1
        %s520 = scalar_lea.sflag [#allocation11], %s519
        %s521 = sand.u32 %s276, 1
        %s522 = smul.addr %s521, 8
        %s523 = scalar_lea.vmem [#allocation10], %s522
        // Predicated region
        $region77: #{tpu_custom_call.1} parent=63 // pred_check
          %p524 = pneg %p289
        $region78: #{tpu_custom_call.1} parent=63 // pred_check_branch
          %526 = sbr.rel (%p524) target = $region80
        $region79: #{tpu_custom_call.1} parent=63 // pred_region
          %528 = dma.done %s520, 128
        $region80: #{tpu_custom_call.1} parent=63 // pred_fallthru
          _
        %s529 = sand.u32 %s36, 1
        %s530 = scalar_lea.sflag [#allocation11], %s529
        %s531 = sand.u32 %s304, 1
        %s532 = smul.addr %s531, 8
        %s533 = scalar_lea.vmem [#allocation12], %s532
        // Predicated region
        $region81: #{tpu_custom_call.1} parent=63 // pred_check
          %p534 = pneg %p317
        $region82: #{tpu_custom_call.1} parent=63 // pred_check_branch
          %536 = sbr.rel (%p534) target = $region84
        $region83: #{tpu_custom_call.1} parent=63 // pred_region
          %538 = dma.done %s530, 128
        $region84: #{tpu_custom_call.1} parent=63 // pred_fallthru
          _
        %s539 = sand.u32 %s56, 1
        %s540 = scalar_lea.sflag [#allocation5], %s539
        %s541 = sand.u32 %s56, 1
        %s542 = scalar_lea.vmem [#allocation4], %s541
        %p543 = pneg %p69
        %p544 = pneg %p66
        %s545 = sand.u32 %s36, 1
        %s546 = scalar_lea.sflag [#allocation8], %s545
        %s547 = sand.u32 %s82, 1
        %s548 = scalar_lea.vmem [#allocation7], %s547
        %p549 = pneg %p95
        %p550 = pneg %p92
        %p551 = scmp.lt.s32.totalorder %s40, 1
        %s552 = scalar_select %p551, %s40, 1
        %s553 = scalar_lea.vmem %s3, %s552
        %p554 = pneg %p121
        %p555 = pneg %p118
        %s556 = sld [smem:[#allocation3]]
        %p557 = scmp.lt.s32.totalorder %s556, 2
        %s558 = scalar_select %p557, %s556, 2
        %s559 = scalar_lea.vmem %s4, %s558
        %p560 = pneg %p149
        %p561 = pneg %p146
        %p562 = pneg %p170
        %p563 = pneg %p167
        %p564 = pneg %p191
        %p565 = pneg %p188
        %p566 = pneg %p212
        %p567 = pneg %p209
        %p568 = pneg %p233
        %p569 = pneg %p230
        %s570 = sand.u32 %s36, 1
        %s571 = scalar_lea.sflag [#allocation8], %s570
        %s572 = sand.u32 %s248, 1
        %s573 = smul.addr %s572, 8
        %s574 = scalar_lea.vmem [#allocation9], %s573
        %p575 = pneg %p261
        %p576 = pneg %p258
        %s577 = sand.u32 %s36, 1
        %s578 = scalar_lea.sflag [#allocation11], %s577
        %s579 = sand.u32 %s276, 1
        %s580 = smul.addr %s579, 8
        %s581 = scalar_lea.vmem [#allocation10], %s580
        %p582 = pneg %p289
        %p583 = pneg %p286
        %s584 = sand.u32 %s36, 1
        %s585 = scalar_lea.sflag [#allocation11], %s584
        %s586 = sand.u32 %s304, 1
        %s587 = smul.addr %s586, 8
        %s588 = scalar_lea.vmem [#allocation12], %s587
        %p589 = pneg %p317
        %p590 = pneg %p314
        %p591 = pneg %p345
        %p592 = pneg %p342
        %s593 = sand.u32 %s332, 1
        %s594 = scalar_lea.sflag [#allocation6], %s593
        %s595 = sand.u32 %s332, 1
        %s596 = smul.addr %s595, 8
        %s597 = scalar_lea.vmem [#allocation13], %s596
        %p598 = scmp.lt.s32.totalorder %s40, 1
        %s599 = scalar_select %p598, %s40, 1
        %s600 = scalar_lea.vmem %s3, %s599
        %s601 = sld [smem:[#allocation3]]
        %p602 = scmp.lt.s32.totalorder %s601, 2
        %s603 = scalar_select %p602, %s601, 2
        %s604 = scalar_lea.vmem %s4, %s603
        %s605 = sld [smem:[#allocation3]]
        %v606 = vld [vmem:[%s604] sm:$0x1]
        %v607 = vld [vmem:[%s494] sm:$0x1]
        %v608 = vadd.f32 %v607, %v606
        %v609 = vld [vmem:[%s503] sm:$0x1]
        %v610 = vadd.f32 %v609, %v606
        %v611 = vld [vmem:[%s5] sm:$0x1]
        %v612 = vmul.f32 %v608, %v611
        %vm613 = vcmask 253952
        %v614 = vsel %vm613, %v612, 0.0
        %615 = vadd.xlane.f32.xlu0 %v614
        %v616 = vpop.xlane.xlu0 %615
        %v617 = vld [vmem:[%s6] sm:$0x1]
        %v618 = vmul.f32 %v610, %v617
        %v619 = vsel %vm613, %v618, 0.0
        %620 = vadd.xlane.f32.xlu0 %v619
        %v621 = vpop.xlane.xlu0 %620
        %v622 = vadd.f32 %v616, %v621
        %v623 = vmul.f32 %v622, 0.5
        %v624 = vld [vmem:[%s600] sm:$0x1]
        %v625 = vadd.f32 %v623, %v624
        %vm626 = vcmp.ge.f32.partialorder %v625, 0.0
        %v627 = vsel %vm626, 1, 0
        %v628 = vcvt.s32.f32 %v627
        %v629 = vsub.f32 1.0, %v628
        %v630 = vld [vmem:[%s513] sm:$0xff]
        %v631 = vld [vmem:[%s523] sm:$0xff]
        %v632 = vld [vmem:[%s533] sm:$0xff]
        %s634 = vtos %v628
        %v635 = vstv %s634
        %v637 = vmul.f32 %v635, %v630
        %s639 = vtos %v629
        %v640 = vstv %s639
        %v642 = vmul.f32 %v640, %v631
        %v643 = vadd.f32 %v637, %v642
        %v644 = vadd.f32 %v643, %v632
        %vm645 = vcmask 261120
        %v646 = vsel %vm645, %v644, 0.0
        %647 = vadd.xlane.f32.xlu0 %v646
        %v648 = vpop.xlane.xlu0 %647
        %v649 = vrcp.pop 32.0
        %v650 = vmul.f32 32.0, %v649
        %v651 = vsub.f32 1.0, %v650
        %v652 = vmul.f32 %v649, %v651
        %v653 = vadd.f32 %v649, %v652
        %vm654 = vweird.f32 %v649
        %v655 = vsel %vm654, %v649, %v653
        %v656 = vmul.f32 %v648, %v655
        %v657 = vsub.f32 %v644, %v656
        %v658 = vmul.f32 %v657, %v657
        %v659 = vsel %vm645, %v658, 0.0
        %660 = vadd.xlane.f32.xlu0 %v659
        %v661 = vpop.xlane.xlu0 %660
        %v662 = vmul.f32 %v661, %v655
        %v663 = vadd.f32 %v662, 1e-05
        %v664 = vrsqrt.pop %v663
        %v665 = vmul.f32 %v664, %v663
        %v666 = vmul.f32 %v665, %v664
        %v667 = vmul.f32 0.5, %v666
        %v668 = vsub.f32 1.5, %v667
        %v669 = vmul.f32 %v664, %v668
        %vm670 = vweird.f32 %v663
        %vm671 = vweird.f32 %v664
        %vm672 = vmor %vm670, %vm671
        %v673 = vsel %vm672, %v664, %v669
        %v674 = vmul.f32 %v657, %v673
        %v675 = vld [vmem:[%s7] sm:$0x1]
        %v677 = vperm.slane %v675, 0
        %v679 = vmul.f32 %v674, %v677
        %v680 = vld [vmem:[%s8] sm:$0x1]
        %v682 = vperm.slane %v680, 0
        %v684 = vadd.f32 %v679, %v682
        %685 = vst.msk [vmem:[%s597] sm:$0xff] %vm645, %v684
        %s686 = sand.u32 %s332, 1
        %s687 = scalar_lea.sflag [#allocation6], %s686
        %s688 = sand.u32 %s332, 1
        %s689 = smul.addr %s688, 8
        %s690 = scalar_lea.vmem [#allocation13], %s689
        // Predicated region
        $region85: #{tpu_custom_call.1} parent=63 // pred_check
          %p691 = pneg %p342
        $region86: #{tpu_custom_call.1} parent=63 // pred_check_branch
          %693 = sbr.rel (%p691) target = $region88
        $region87: #{tpu_custom_call.1} parent=63 // pred_region
          %695 = vsyncadd %s687, 0
          %s696 = sadd.s32 %s41, %s40
          %s697 = smul.addr %s696, 8
          %s698 = scalar_lea.hbm %s12, %s697
          %s700 = sshll.u32 %s690, 4
          %s701 = int_to_ptr.vmem [resolvable:$true] %s700
          %s702 = sshll.u32 %s698, 4
          %s703 = int_to_ptr.hbm [resolvable:$true] %s702
          %705 = dma.vmem_to_hbm [thread:$0]  %s701, 128, %s703, %s687
        $region88: #{tpu_custom_call.1} parent=63 // pred_fallthru
          _
      $region64: #{tpu_custom_call.1} parent=5 // pred_fallthru
        _
      %p706 = scmp.le.s32.totalorder 2, %s31
      // Predicated region
      $region89: #{tpu_custom_call.1} parent=5 // pred_check
        %p707 = pneg %p706
      $region90: #{tpu_custom_call.1} parent=5 // pred_check_branch
        %709 = sbr.rel (%p707) target = $region92
      $region91: #{tpu_custom_call.1} parent=5 // pred_region
        %s710 = ssub.s32 %s31, 2
        // Predicated region
        $region93: #{tpu_custom_call.1} parent=91 // pred_check
          %p711 = pneg %p348
        $region94: #{tpu_custom_call.1} parent=91 // pred_check_branch
          %713 = sbr.rel (%p711) target = $region96
        $region95: #{tpu_custom_call.1} parent=91 // pred_region
          %s714 = sand.u32 %s333, 1
          %s715 = scalar_lea.sflag [#allocation6], %s714
          %s716 = sand.u32 %s333, 1
          %s717 = smul.addr %s716, 8
          %s718 = scalar_lea.vmem [#allocation13], %s717
          %720 = dma.done %s715, 128
        $region96: #{tpu_custom_call.1} parent=91 // pred_fallthru
          _
      $region92: #{tpu_custom_call.1} parent=5 // pred_fallthru
        _
    $region6: #{tpu_custom_call.1} parent=1 // loop_footer
      %s35 = sadd.s32 1, %s31
    $region7: #{tpu_custom_call.1} parent=1 // loop_footer_branch
      %30 = sbr.rel target = $region3
    $region8: #{tpu_custom_call.1} parent=1 // loop_exit
      _
    %721 = vsyncpa [#allocation5], 1
    %s722 = scalar_lea.sflag [#allocation5], 1
    %723 = vsyncpa %s722, 1
    %724 = vsyncpa [#allocation8], 1
    %s725 = scalar_lea.sflag [#allocation8], 1
    %726 = vsyncpa %s725, 1
    %727 = vsyncpa [#allocation11], 1
    %s728 = scalar_lea.sflag [#allocation11], 1
    %729 = vsyncpa %s728, 1
    %730 = vsyncpa [#allocation6], 1
    %s731 = scalar_lea.sflag [#allocation6], 1
    %732 = vsyncpa %s731, 1

</llo_original>
